<compile_context>
chip_gen: v7x
topology: tpu7x:2x2x1
jax: 0.10.0
libtpu: 0.0.40
codegen_flags: <defaults>
</compile_context>

<pallas_src>
import functools

import jax
import jax.numpy as jnp
from jax.experimental import pallas as pl
from jax.experimental.pallas import tpu as pltpu

_LANE = 128
_SUBLANE = 8
_OUT_PAD = 128      # 24 (box3D) + 4 (box2D) real columns in a lane-dense slab
_OUT_REAL = 28


def _round_up(x, m):
    return ((x + m - 1) // m) * m


def _cdiv(a, b):
    return -(-a // b)


def _vmem_capacity_bytes():
    try:
        return int(pltpu.get_tpu_info().vmem_capacity_bytes)
    except Exception:
        return 64 << 20          # conservative: v7x per-TensorCore VMEM


def _heads_kernel(x_ref, w1_ref, b1_ref, w2_ref, b2_ref, o_ref):
    """One (tm, Dp) row tile x one (th,) hidden slice of both fused heads."""
    k = pl.program_id(1)

    # In-kernel cast of the activation stream to the MXU operand dtype (bf16 by
    # default); x stays f32 in HBM so there is no extra XLA cast pass.
    x = x_ref[...].astype(w1_ref.dtype)

    # Layer 1 slice: f32 MXU accumulation + f32 bias, then a single fused
    # cast+ReLU so the (tm, th) intermediate is materialized once, in the
    # matmul-2 operand dtype.
    h = jnp.dot(x, w1_ref[...], preferred_element_type=jnp.float32) + b1_ref[...]
    h = jnp.maximum(h.astype(w2_ref.dtype), 0.0)

    # Layer 2 slice (block-diagonal fused heads): partial contribution of this
    # hidden slice to the 128-wide output slab.
    part = jnp.dot(h, w2_ref[...], preferred_element_type=jnp.float32)

    # The output block is resident across the hidden axis -> accumulate in place.
    @pl.when(k == 0)
    def _():
        o_ref[...] = part + b2_ref[...]

    @pl.when(k != 0)
    def _():
        o_ref[...] += part


def _fuse_params(params, d_pad, h_pad, compute_dtype):
    """Fuse the two heads: wide layer-1 and block-diagonal layer-2 (padded)."""
    w1a, b1a, w2a, b2a, w1b, b1b, w2b, b2b = params
    d = w1a.shape[0]

    w1_f = jnp.zeros((d_pad, h_pad), jnp.float32)
    w1_f = w1_f.at[:d, :d].set(w1a).at[:d, d:2 * d].set(w1b)
    b1_f = jnp.zeros((1, h_pad), jnp.float32)
    b1_f = b1_f.at[0, :d].set(b1a).at[0, d:2 * d].set(b1b)

    w2_f = jnp.zeros((h_pad, _OUT_PAD), jnp.float32)
    w2_f = w2_f.at[:d, :24].set(w2a).at[d:2 * d, 24:28].set(w2b)
    b2_f = jnp.zeros((1, _OUT_PAD), jnp.float32)
    b2_f = b2_f.at[0, :24].set(b2a).at[0, 24:28].set(b2b)

    # Only matmul operands are cast; biases stay f32 (added to f32 accumulators).
    return (w1_f.astype(compute_dtype), b1_f, w2_f.astype(compute_dtype), b2_f)


def _vmem_need_bytes(tm, d_pad, th, kh, w_itemsize):
    """Working-set estimate: weights counted once when resident (kh == 1)."""
    nbuf_w = 1 if kh == 1 else 2
    weights = nbuf_w * ((d_pad * th + th * _OUT_PAD) * w_itemsize + th * 4)
    weights += _OUT_PAD * 4                        # b2 (always single-buffered)
    x_tiles = 2 * tm * d_pad * 4                   # f32 x tile, double-buffered
    o_tiles = 2 * tm * _OUT_PAD * 4                # f32 out tile, double-buffered
    hidden = tm * th * (4 + w_itemsize)            # f32 acc + cast copy of h
    return weights + x_tiles + o_tiles + hidden


@functools.partial(jax.jit,
                   static_argnames=("tm", "use_bf16", "h_tile",
                                    "single_buffer_weights"))
def _prediction_heads_impl(decoder_out, params, *, tm, use_bf16, h_tile,
                           single_buffer_weights):
    M, D = decoder_out.shape
    compute_dtype = jnp.bfloat16 if use_bf16 else jnp.float32
    w_itemsize = jnp.dtype(compute_dtype).itemsize

    d_pad = _round_up(D, _LANE)
    h_real = 2 * D                                  # [head A | head B] hidden
    h_pad0 = _round_up(h_real, _LANE)

    vmem_budget = int(0.85 * _vmem_capacity_bytes())

    # --- row tiling ---------------------------------------------------------
    m_rows = _round_up(M, _SUBLANE)
    tm_eff = min(_round_up(tm, _SUBLANE), m_rows)
    # Keep >= 2 row steps when there is enough work so the "parallel" axis can
    # shard across both TensorCores of a v7x chip (near-free on v5e/v6e).
    if m_rows >= 2 * _LANE and m_rows // tm_eff < 2:
        tm_eff = _round_up(_cdiv(m_rows, 2), _SUBLANE)
    m_pad = _round_up(M, tm_eff)

    # --- hidden tiling (fallback for very large d_model) ---------------------
    if h_tile is not None:
        th = min(_round_up(h_tile, _LANE), h_pad0)
    else:
        th = h_pad0
        while th > _LANE:
            kh_try = _cdiv(h_pad0, th)
            if _vmem_need_bytes(tm_eff, d_pad, th, kh_try,
                                w_itemsize) <= vmem_budget:
                break
            th = max(_LANE, _round_up(th // 2, _LANE))
    kh = _cdiv(h_pad0, th)
    h_pad = kh * th
    resident = (kh == 1)

    w1_f, b1_f, w2_f, b2_f = _fuse_params(params, d_pad, h_pad, compute_dtype)

    # x stays in its input dtype (f32); the cast happens inside the kernel.
    # Only pad when the shapes actually need it.
    x = decoder_out
    if (m_pad, d_pad) != (M, D):
        x = jnp.zeros((m_pad, d_pad), decoder_out.dtype).at[:M, :D].set(x)

    need = _vmem_need_bytes(tm_eff, d_pad, th, kh, w_itemsize)
    vmem_limit = int(min(vmem_budget, max(2 * need + (4 << 20), 32 << 20)))

    def wspec(shape, index_map, constant):
        # Single-buffer grid-invariant (resident) weight/bias blocks.
        if single_buffer_weights and constant:
            return pl.BlockSpec(shape, index_map, pipeline_mode=pl.Buffered(1))
        return pl.BlockSpec(shape, index_map)

    out = pl.pallas_call(
        _heads_kernel,
        out_shape=jax.ShapeDtypeStruct((m_pad, _OUT_PAD), jnp.float32),
        grid_spec=pltpu.PrefetchScalarGridSpec(
            num_scalar_prefetch=0,
            grid=(m_pad // tm_eff, kh),
            in_specs=[
                pl.BlockSpec((tm_eff, d_pad), lambda i, k: (i, 0)),      # x
                wspec((d_pad, th), lambda i, k: (0, k), resident),       # W1_f
                wspec((1, th), lambda i, k: (0, k), resident),           # b1_f
                wspec((th, _OUT_PAD), lambda i, k: (k, 0), resident),    # W2_f
                wspec((1, _OUT_PAD), lambda i, k: (0, 0), True),         # b2_f
            ],
            out_specs=pl.BlockSpec((tm_eff, _OUT_PAD), lambda i, k: (i, 0)),
        ),
        compiler_params=pltpu.CompilerParams(
            dimension_semantics=("parallel", "arbitrary"),
            vmem_limit_bytes=vmem_limit),
    )(x, w1_f, b1_f, w2_f, b2_f)

    out = out[:M]
    pred_3d = out[:, :24].reshape(-1, 8, 3)
    pred_2d = out[:, 24:_OUT_REAL]
    return pred_3d, pred_2d


def prediction_heads(decoder_out, params, *, tm=512, use_bf16=True, h_tile=None):
    """decoder_out: (M, D) -> ((M, 8, 3) box3D preds, (M, 4) box2D preds)."""
    try:
        return _prediction_heads_impl(decoder_out, params, tm=tm,
                                      use_bf16=use_bf16, h_tile=h_tile,
                                      single_buffer_weights=True)
    except Exception:
        # Fallback if this jax build rejects pipeline_mode=pl.Buffered(1) on the
        # top-level pallas_call pipeline; semantics identical, just 2x-buffered
        # resident weights.
        return _prediction_heads_impl(decoder_out, params, tm=tm,
                                      use_bf16=use_bf16, h_tile=h_tile,
                                      single_buffer_weights=False)


def init_params(key, d_model):
    """Deterministic synthetic parameters (shapes match the nn.Linear layers)."""
    ks = jax.random.split(key, 8)
    scale = 0.02
    w1a = scale * jax.random.normal(ks[0], (d_model, d_model), jnp.float32)
    b1a = scale * jax.random.normal(ks[1], (d_model,), jnp.float32)
    w2a = scale * jax.random.normal(ks[2], (d_model, 24), jnp.float32)
    b2a = scale * jax.random.normal(ks[3], (24,), jnp.float32)
    w1b = scale * jax.random.normal(ks[4], (d_model, d_model), jnp.float32)
    b1b = scale * jax.random.normal(ks[5], (d_model,), jnp.float32)
    w2b = scale * jax.random.normal(ks[6], (d_model, 4), jnp.float32)
    b2b = scale * jax.random.normal(ks[7], (4,), jnp.float32)
    return (w1a, b1a, w2a, b2a, w1b, b1b, w2b, b2b)


def reference(decoder_out, params):
    w1a, b1a, w2a, b2a, w1b, b1b, w2b, b2b = params
    h3 = jnp.maximum(decoder_out @ w1a + b1a, 0.0)
    p3 = (h3 @ w2a + b2a).reshape(-1, 8, 3)
    h2 = jnp.maximum(decoder_out @ w1b + b1b, 0.0)
    p2 = h2 @ w2b + b2b
    return p3, p2


if __name__ == "__main__":
    key = jax.random.PRNGKey(0)
    kx, kp, kx2, kp2 = jax.random.split(key, 4)

    # --- small-shape check (M=16 tokens, d_model=32), exact f32 path --------
    M, D = 16, 32
    x = jax.random.normal(kx, (M, D), jnp.float32)
    params = init_params(kp, D)

    p3, p2 = prediction_heads(x, params, use_bf16=False)
    jax.block_until_ready((p3, p2))
    r3, r2 = reference(x, params)
    assert p3.shape == (M, 8, 3) and p2.shape == (M, 4)
    assert jnp.allclose(p3, r3, atol=1e-5, rtol=1e-5)
    assert jnp.allclose(p2, r2, atol=1e-5, rtol=1e-5)

    # --- multi row-tile (>=2 grid steps) and hidden-tiled accumulation paths -
    M2, D2 = 256, 128
    x2 = jax.random.normal(kx2, (M2, D2), jnp.float32)
    params2 = init_params(kp2, D2)
    r3b, r2b = reference(x2, params2)

    p3b, p2b = prediction_heads(x2, params2, use_bf16=False)
    jax.block_until_ready((p3b, p2b))
    assert jnp.allclose(p3b, r3b, atol=1e-5, rtol=1e-5)
    assert jnp.allclose(p2b, r2b, atol=1e-5, rtol=1e-5)

    p3h, p2h = prediction_heads(x2, params2, use_bf16=False, h_tile=128)  # kh == 2
    jax.block_until_ready((p3h, p2h))
    assert jnp.allclose(p3h, r3b, atol=1e-5, rtol=1e-5)
    assert jnp.allclose(p2h, r2b, atol=1e-5, rtol=1e-5)

    # --- default fast path: bf16 MXU operands (relaxed tolerance) -----------
    p3f, p2f = prediction_heads(x2, params2)
    jax.block_until_ready((p3f, p2f))
    assert jnp.allclose(p3f, r3b, atol=5e-2, rtol=5e-2)
    assert jnp.allclose(p2f, r2b, atol=5e-2, rtol=5e-2)

    print("KERNEL_OK")
</pallas_src>

<mosaic_0001>
module attributes {stable_mosaic.version = 11 : i64} {
  func.func @_heads_kernel(%arg0: i32, %arg1: i32, %arg2: memref<16x128xf32, #tpu.memory_space<vmem>>, %arg3: memref<128x128xf32, #tpu.memory_space<vmem>>, %arg4: memref<1x128xf32, #tpu.memory_space<vmem>>, %arg5: memref<128x128xf32, #tpu.memory_space<vmem>>, %arg6: memref<1x128xf32, #tpu.memory_space<vmem>>, %arg7: memref<16x128xf32, #tpu.memory_space<vmem>>) attributes {dimension_semantics = [#tpu.dimension_semantics<parallel>, #tpu.dimension_semantics<arbitrary>], iteration_bounds = array<i64: 1, 1>, scalar_prefetch = 0 : i64, scratch_operands = 0 : i64, tpu.core_type = #tpu.core_type<tc>, window_params = [{transform_indices = @transform_0, window_bounds = array<i64: 16, 128>}, {pipeline_mode = #tpu.pipeline_mode<synchronous>, transform_indices = @transform_1, window_bounds = array<i64: 128, 128>}, {pipeline_mode = #tpu.pipeline_mode<synchronous>, transform_indices = @transform_2, window_bounds = array<i64: 1, 128>}, {pipeline_mode = #tpu.pipeline_mode<synchronous>, transform_indices = @transform_3, window_bounds = array<i64: 128, 128>}, {pipeline_mode = #tpu.pipeline_mode<synchronous>, transform_indices = @transform_4, window_bounds = array<i64: 1, 128>}, {transform_indices = @transform_5, window_bounds = array<i64: 16, 128>}]} {
    %c0 = arith.constant 0 : index
    %c0_0 = arith.constant 0 : index
    %0 = vector.load %arg2[%c0, %c0_0] : memref<16x128xf32, #tpu.memory_space<vmem>>, vector<16x128xf32>
    %c0_1 = arith.constant 0 : index
    %c0_2 = arith.constant 0 : index
    %1 = vector.load %arg3[%c0_1, %c0_2] : memref<128x128xf32, #tpu.memory_space<vmem>>, vector<128x128xf32>
    %cst = arith.constant dense<0.000000e+00> : vector<16x128xf32>
    %2 = tpu.matmul %0, %1, %cst {dimension_numbers = #tpu.dot_dimension_numbers<[1], [0], [0], [1], [0, 0, 1, 1], [], []>} : vector<16x128xf32>, vector<128x128xf32>, vector<16x128xf32> -> vector<16x128xf32>
    %c0_3 = arith.constant 0 : index
    %c0_4 = arith.constant 0 : index
    %3 = vector.load %arg4[%c0_3, %c0_4] : memref<1x128xf32, #tpu.memory_space<vmem>>, vector<1x128xf32>
    %4 = vector.broadcast %3 : vector<1x128xf32> to vector<16x128xf32>
    %5 = arith.addf %2, %4 : vector<16x128xf32>
    %cst_5 = arith.constant 0.000000e+00 : f32
    %6 = vector.broadcast %cst_5 : f32 to vector<16x128xf32>
    %7 = arith.maximumf %5, %6 : vector<16x128xf32>
    %c0_6 = arith.constant 0 : index
    %c0_7 = arith.constant 0 : index
    %8 = vector.load %arg5[%c0_6, %c0_7] : memref<128x128xf32, #tpu.memory_space<vmem>>, vector<128x128xf32>
    %cst_8 = arith.constant dense<0.000000e+00> : vector<16x128xf32>
    %9 = tpu.matmul %7, %8, %cst_8 {dimension_numbers = #tpu.dot_dimension_numbers<[1], [0], [0], [1], [0, 0, 1, 1], [], []>} : vector<16x128xf32>, vector<128x128xf32>, vector<16x128xf32> -> vector<16x128xf32>
    %c0_i32 = arith.constant 0 : i32
    %10 = arith.cmpi eq, %arg1, %c0_i32 : i32
    %11 = arith.extui %10 : i1 to i32
    %c0_i32_9 = arith.constant 0 : i32
    %12 = arith.cmpi ne, %11, %c0_i32_9 : i32
    scf.if %12 {
      %c0_12 = arith.constant 0 : index
      %c0_13 = arith.constant 0 : index
      %16 = vector.load %arg6[%c0_12, %c0_13] : memref<1x128xf32, #tpu.memory_space<vmem>>, vector<1x128xf32>
      %17 = vector.broadcast %16 : vector<1x128xf32> to vector<16x128xf32>
      %18 = arith.addf %9, %17 : vector<16x128xf32>
      %c0_14 = arith.constant 0 : index
      %c0_15 = arith.constant 0 : index
      %19 = vector.load %arg7[%c0_14, %c0_15] : memref<16x128xf32, #tpu.memory_space<vmem>>, vector<16x128xf32>
      tpu.vector_store %arg7[%c0_14, %c0_15], %18 {strides = array<i32>} : memref<16x128xf32, #tpu.memory_space<vmem>>, vector<16x128xf32>,
    } else {
    }
    %c0_i32_10 = arith.constant 0 : i32
    %13 = arith.cmpi ne, %arg1, %c0_i32_10 : i32
    %14 = arith.extui %13 : i1 to i32
    %c0_i32_11 = arith.constant 0 : i32
    %15 = arith.cmpi ne, %14, %c0_i32_11 : i32
    scf.if %15 {
      %c0_12 = arith.constant 0 : index
      %c0_13 = arith.constant 0 : index
      %16 = vector.load %arg7[%c0_12, %c0_13] : memref<16x128xf32, #tpu.memory_space<vmem>>, vector<16x128xf32>
      %17 = arith.addf %16, %9 : vector<16x128xf32>
      %c0_14 = arith.constant 0 : index
      %c0_15 = arith.constant 0 : index
      %18 = vector.load %arg7[%c0_14, %c0_15] : memref<16x128xf32, #tpu.memory_space<vmem>>, vector<16x128xf32>
      tpu.vector_store %arg7[%c0_14, %c0_15], %17 {strides = array<i32>} : memref<16x128xf32, #tpu.memory_space<vmem>>, vector<16x128xf32>,
    } else {
    }
    return
  }
  func.func @transform_0(%arg0: i32, %arg1: i32) -> (i32, i32) {
    %c0_i32 = arith.constant 0 : i32
    %c0_i32_0 = arith.constant 0 : i32
    return %arg0, %c0_i32 : i32, i32
  }
  func.func @transform_1(%arg0: i32, %arg1: i32) -> (i32, i32) {
    %c0_i32 = arith.constant 0 : i32
    %c0_i32_0 = arith.constant 0 : i32
    return %c0_i32, %arg1 : i32, i32
  }
  func.func @transform_2(%arg0: i32, %arg1: i32) -> (i32, i32) {
    %c0_i32 = arith.constant 0 : i32
    %c0_i32_0 = arith.constant 0 : i32
    return %c0_i32, %arg1 : i32, i32
  }
  func.func @transform_3(%arg0: i32, %arg1: i32) -> (i32, i32) {
    %c0_i32 = arith.constant 0 : i32
    %c0_i32_0 = arith.constant 0 : i32
    return %arg1, %c0_i32 : i32, i32
  }
  func.func @transform_4(%arg0: i32, %arg1: i32) -> (i32, i32) {
    %c0_i32 = arith.constant 0 : i32
    %c0_i32_0 = arith.constant 0 : i32
    %c0_i32_1 = arith.constant 0 : i32
    return %c0_i32, %c0_i32_0 : i32, i32
  }
  func.func @transform_5(%arg0: i32, %arg1: i32) -> (i32, i32) {
    %c0_i32 = arith.constant 0 : i32
    %c0_i32_0 = arith.constant 0 : i32
    return %arg0, %c0_i32 : i32, i32
  }
}

module attributes {stable_mosaic.version = 11 : i64} {
  func.func @_heads_kernel(%arg0: i32, %arg1: i32, %arg2: memref<16x128xf32, #tpu.memory_space<vmem>>, %arg3: memref<128x128xf32, #tpu.memory_space<vmem>>, %arg4: memref<1x128xf32, #tpu.memory_space<vmem>>, %arg5: memref<128x128xf32, #tpu.memory_space<vmem>>, %arg6: memref<1x128xf32, #tpu.memory_space<vmem>>, %arg7: memref<16x128xf32, #tpu.memory_space<vmem>>) attributes {dimension_semantics = [#tpu.dimension_semantics<parallel>, #tpu.dimension_semantics<arbitrary>], iteration_bounds = array<i64: 1, 1>, scalar_prefetch = 0 : i64, scratch_operands = 0 : i64, tpu.core_type = #tpu.core_type<tc>, window_params = [{transform_indices = @transform_0, window_bounds = array<i64: 16, 128>}, {transform_indices = @transform_1, window_bounds = array<i64: 128, 128>}, {transform_indices = @transform_2, window_bounds = array<i64: 1, 128>}, {transform_indices = @transform_3, window_bounds = array<i64: 128, 128>}, {pipeline_mode = #tpu.pipeline_mode<synchronous>, transform_indices = @transform_4, window_bounds = array<i64: 1, 128>}, {transform_indices = @transform_5, window_bounds = array<i64: 16, 128>}]} {
    %c0 = arith.constant 0 : index
    %c0_0 = arith.constant 0 : index
    %0 = vector.load %arg2[%c0, %c0_0] : memref<16x128xf32, #tpu.memory_space<vmem>>, vector<16x128xf32>
    %c0_1 = arith.constant 0 : index
    %c0_2 = arith.constant 0 : index
    %1 = vector.load %arg3[%c0_1, %c0_2] : memref<128x128xf32, #tpu.memory_space<vmem>>, vector<128x128xf32>
    %cst = arith.constant dense<0.000000e+00> : vector<16x128xf32>
    %2 = tpu.matmul %0, %1, %cst {dimension_numbers = #tpu.dot_dimension_numbers<[1], [0], [0], [1], [0, 0, 1, 1], [], []>} : vector<16x128xf32>, vector<128x128xf32>, vector<16x128xf32> -> vector<16x128xf32>
    %c0_3 = arith.constant 0 : index
    %c0_4 = arith.constant 0 : index
    %3 = vector.load %arg4[%c0_3, %c0_4] : memref<1x128xf32, #tpu.memory_space<vmem>>, vector<1x128xf32>
    %4 = vector.broadcast %3 : vector<1x128xf32> to vector<16x128xf32>
    %5 = arith.addf %2, %4 : vector<16x128xf32>
    %cst_5 = arith.constant 0.000000e+00 : f32
    %6 = vector.broadcast %cst_5 : f32 to vector<16x128xf32>
    %7 = arith.maximumf %5, %6 : vector<16x128xf32>
    %c0_6 = arith.constant 0 : index
    %c0_7 = arith.constant 0 : index
    %8 = vector.load %arg5[%c0_6, %c0_7] : memref<128x128xf32, #tpu.memory_space<vmem>>, vector<128x128xf32>
    %cst_8 = arith.constant dense<0.000000e+00> : vector<16x128xf32>
    %9 = tpu.matmul %7, %8, %cst_8 {dimension_numbers = #tpu.dot_dimension_numbers<[1], [0], [0], [1], [0, 0, 1, 1], [], []>} : vector<16x128xf32>, vector<128x128xf32>, vector<16x128xf32> -> vector<16x128xf32>
    %c0_i32 = arith.constant 0 : i32
    %10 = arith.cmpi eq, %arg1, %c0_i32 : i32
    %11 = arith.extui %10 : i1 to i32
    %c0_i32_9 = arith.constant 0 : i32
    %12 = arith.cmpi ne, %11, %c0_i32_9 : i32
    scf.if %12 {
      %c0_12 = arith.constant 0 : index
      %c0_13 = arith.constant 0 : index
      %16 = vector.load %arg6[%c0_12, %c0_13] : memref<1x128xf32, #tpu.memory_space<vmem>>, vector<1x128xf32>
      %17 = vector.broadcast %16 : vector<1x128xf32> to vector<16x128xf32>
      %18 = arith.addf %9, %17 : vector<16x128xf32>
      %c0_14 = arith.constant 0 : index
      %c0_15 = arith.constant 0 : index
      %19 = vector.load %arg7[%c0_14, %c0_15] : memref<16x128xf32, #tpu.memory_space<vmem>>, vector<16x128xf32>
      tpu.vector_store %arg7[%c0_14, %c0_15], %18 {strides = array<i32>} : memref<16x128xf32, #tpu.memory_space<vmem>>, vector<16x128xf32>,
    } else {
    }
    %c0_i32_10 = arith.constant 0 : i32
    %13 = arith.cmpi ne, %arg1, %c0_i32_10 : i32
    %14 = arith.extui %13 : i1 to i32
    %c0_i32_11 = arith.constant 0 : i32
    %15 = arith.cmpi ne, %14, %c0_i32_11 : i32
    scf.if %15 {
      %c0_12 = arith.constant 0 : index
      %c0_13 = arith.constant 0 : index
      %16 = vector.load %arg7[%c0_12, %c0_13] : memref<16x128xf32, #tpu.memory_space<vmem>>, vector<16x128xf32>
      %17 = arith.addf %16, %9 : vector<16x128xf32>
      %c0_14 = arith.constant 0 : index
      %c0_15 = arith.constant 0 : index
      %18 = vector.load %arg7[%c0_14, %c0_15] : memref<16x128xf32, #tpu.memory_space<vmem>>, vector<16x128xf32>
      tpu.vector_store %arg7[%c0_14, %c0_15], %17 {strides = array<i32>} : memref<16x128xf32, #tpu.memory_space<vmem>>, vector<16x128xf32>,
    } else {
    }
    return
  }
  func.func @transform_0(%arg0: i32, %arg1: i32) -> (i32, i32) {
    %c0_i32 = arith.constant 0 : i32
    %c0_i32_0 = arith.constant 0 : i32
    return %arg0, %c0_i32 : i32, i32
  }
  func.func @transform_1(%arg0: i32, %arg1: i32) -> (i32, i32) {
    %c0_i32 = arith.constant 0 : i32
    %c0_i32_0 = arith.constant 0 : i32
    return %c0_i32, %arg1 : i32, i32
  }
  func.func @transform_2(%arg0: i32, %arg1: i32) -> (i32, i32) {
    %c0_i32 = arith.constant 0 : i32
    %c0_i32_0 = arith.constant 0 : i32
    return %c0_i32, %arg1 : i32, i32
  }
  func.func @transform_3(%arg0: i32, %arg1: i32) -> (i32, i32) {
    %c0_i32 = arith.constant 0 : i32
    %c0_i32_0 = arith.constant 0 : i32
    return %arg1, %c0_i32 : i32, i32
  }
  func.func @transform_4(%arg0: i32, %arg1: i32) -> (i32, i32) {
    %c0_i32 = arith.constant 0 : i32
    %c0_i32_0 = arith.constant 0 : i32
    %c0_i32_1 = arith.constant 0 : i32
    return %c0_i32, %c0_i32_0 : i32, i32
  }
  func.func @transform_5(%arg0: i32, %arg1: i32) -> (i32, i32) {
    %c0_i32 = arith.constant 0 : i32
    %c0_i32_0 = arith.constant 0 : i32
    return %arg0, %c0_i32 : i32, i32
  }
}

</mosaic_0001>

<llo_original>
// kernel: _prediction_heads_impl.1
$region0: #{_prediction_heads_impl.1}
  #allocation0 [shape = 'u32[]', space=smem, size = 0x4, offset = 0x4, fixed_abs, tag = 'smem constant byte address 0x4 - core index']
  #allocation1 [shape = 'u32[144,128]{1,0:T(1,128)}', space=vmem, size = 0x12000, scoped, tag = 'internal scratch']
  %s0 = inlined_call_operand.vmem [shape: f32[16,128], index: 0, kind: input, shape index: {}]
  %s1 = inlined_call_operand.vmem [shape: f32[128,128], index: 1, kind: input, shape index: {}]
  %s2 = inlined_call_operand.vmem [shape: f32[1,128], index: 2, kind: input, shape index: {}]
  %s3 = inlined_call_operand.vmem [shape: f32[128,128], index: 3, kind: input, shape index: {}]
  %s4 = inlined_call_operand.vmem [shape: f32[1,128], index: 4, kind: input, shape index: {}]
  %s5 = inlined_call_operand.vmem [shape: f32[16,128], index: 5, kind: output, shape index: {}]
  %s6 = sld [smem:[#allocation0]]
  $region38: #{_prediction_heads_impl.1} parent=0
    _
  %s8 = ssub.s32 1, %s6
  %s9 = scalar_select 0, %s8, %s6
  // Predicated region
  $region2: #{_prediction_heads_impl.1} parent=0 // pred_check
    _
  $region3: #{_prediction_heads_impl.1} parent=0 // pred_check_branch
    %11 = sbr.rel (0) target = $region5
  $region4: #{_prediction_heads_impl.1} parent=0 // pred_region
    _
  $region5: #{_prediction_heads_impl.1} parent=0 // pred_fallthru
    _
  // Predicated region
  $region6: #{_prediction_heads_impl.1} parent=0 // pred_check
    _
  $region7: #{_prediction_heads_impl.1} parent=0 // pred_check_branch
    %13 = sbr.rel (0) target = $region9
  $region8: #{_prediction_heads_impl.1} parent=0 // pred_region
    _
  $region9: #{_prediction_heads_impl.1} parent=0 // pred_fallthru
    _
  // Predicated region
  $region10: #{_prediction_heads_impl.1} parent=0 // pred_check
    _
  $region11: #{_prediction_heads_impl.1} parent=0 // pred_check_branch
    %15 = sbr.rel (0) target = $region13
  $region12: #{_prediction_heads_impl.1} parent=0 // pred_region
    _
  $region13: #{_prediction_heads_impl.1} parent=0 // pred_fallthru
    _
  // Predicated region
  $region14: #{_prediction_heads_impl.1} parent=0 // pred_check
    _
  $region15: #{_prediction_heads_impl.1} parent=0 // pred_check_branch
    %17 = sbr.rel (0) target = $region17
  $region16: #{_prediction_heads_impl.1} parent=0 // pred_region
    _
  $region17: #{_prediction_heads_impl.1} parent=0 // pred_fallthru
    _
  // Predicated region
  $region18: #{_prediction_heads_impl.1} parent=0 // pred_check
    _
  $region19: #{_prediction_heads_impl.1} parent=0 // pred_check_branch
    %19 = sbr.rel (0) target = $region21
  $region20: #{_prediction_heads_impl.1} parent=0 // pred_region
    _
  $region21: #{_prediction_heads_impl.1} parent=0 // pred_fallthru
    _
  %v20 = vld [vmem:[%s0] sm:$0xff]
  %v21 = vld [vmem:[%s0 + $0x8] sm:$0xff]
  %v22 = vld [vmem:[%s1] sm:$0xff]
  %v23 = vld [vmem:[%s1 + $0x8] sm:$0xff]
  %v24 = vld [vmem:[%s1 + $0x10] sm:$0xff]
  %v25 = vld [vmem:[%s1 + $0x18] sm:$0xff]
  %v26 = vld [vmem:[%s1 + $0x20] sm:$0xff]
  %v27 = vld [vmem:[%s1 + $0x28] sm:$0xff]
  %v28 = vld [vmem:[%s1 + $0x30] sm:$0xff]
  %v29 = vld [vmem:[%s1 + $0x38] sm:$0xff]
  %v30 = vld [vmem:[%s1 + $0x40] sm:$0xff]
  %v31 = vld [vmem:[%s1 + $0x48] sm:$0xff]
  %v32 = vld [vmem:[%s1 + $0x50] sm:$0xff]
  %v33 = vld [vmem:[%s1 + $0x58] sm:$0xff]
  %v34 = vld [vmem:[%s1 + $0x60] sm:$0xff]
  %v35 = vld [vmem:[%s1 + $0x68] sm:$0xff]
  %v36 = vld [vmem:[%s1 + $0x70] sm:$0xff]
  %v37 = vld [vmem:[%s1 + $0x78] sm:$0xff]
  %v38 = vld [vmem:[%s2] sm:$0x1]
  %v40 = vlaneseq
  %v41 = vshrl.u32 %v40, 7
  %v42 = vsub.s32 0, %v41
  %v43 = vrot.slane %v38, %v42
  %45 = vmatprep.subr.mxu0 0.0
  %46 = vmatpush1.msra.mxu0 %v22
  %47 = vmatprep.subr.mxu0 0.0
  %48 = vmatpush1.msra.mxu0 %v23
  %49 = vmatprep.subr.mxu0 0.0
  %50 = vmatpush1.msra.mxu0 %v24
  %51 = vmatprep.subr.mxu0 0.0
  %52 = vmatpush1.msra.mxu0 %v25
  %53 = vmatprep.subr.mxu0 0.0
  %54 = vmatpush1.msra.mxu0 %v26
  %55 = vmatprep.subr.mxu0 0.0
  %56 = vmatpush1.msra.mxu0 %v27
  %57 = vmatprep.subr.mxu0 0.0
  %58 = vmatpush1.msra.mxu0 %v28
  %59 = vmatprep.subr.mxu0 0.0
  %60 = vmatpush1.msra.mxu0 %v29
  %61 = vmatprep.subr.mxu0 0.0
  %62 = vmatpush1.msra.mxu0 %v30
  %63 = vmatprep.subr.mxu0 0.0
  %64 = vmatpush1.msra.mxu0 %v31
  %65 = vmatprep.subr.mxu0 0.0
  %66 = vmatpush1.msra.mxu0 %v32
  %67 = vmatprep.subr.mxu0 0.0
  %68 = vmatpush1.msra.mxu0 %v33
  %69 = vmatprep.subr.mxu0 0.0
  %70 = vmatpush1.msra.mxu0 %v34
  %71 = vmatprep.subr.mxu0 0.0
  %72 = vmatpush1.msra.mxu0 %v35
  %73 = vmatprep.subr.mxu0 0.0
  %74 = vmatpush1.msra.mxu0 %v36
  %75 = vmatprep.subr.mxu0 0.0
  %76 = vmatpush1.msra.mxu0 %v37
  %77 = vmatprep.subr.mxu0 0.0
  %78 = vmatpush1.msra.mxu0 0.0
  %79 = vmatprep.subr.mxu0 0.0
  %80 = vmatpush1.msra.mxu0 0.0
  %81 = vmatprep.subr.mxu0 0.0
  %82 = vmatpush1.msra.mxu0 0.0
  %83 = vmatprep.subr.mxu0 0.0
  %84 = vmatpush1.msra.mxu0 0.0
  %85 = vmatprep.subr.mxu0 0.0
  %86 = vmatpush1.msra.mxu0 0.0
  %87 = vmatprep.subr.mxu0 0.0
  %88 = vmatpush1.msra.mxu0 0.0
  %89 = vmatprep.subr.mxu0 0.0
  %90 = vmatpush1.msra.mxu0 0.0
  %91 = vmatprep.subr.mxu0 0.0
  %92 = vmatpush1.msra.mxu0 0.0
  %93 = vmatprep.subr.mxu0 0.0
  %94 = vmatpush1.msra.mxu0 0.0
  %95 = vmatprep.subr.mxu0 0.0
  %96 = vmatpush1.msra.mxu0 0.0
  %97 = vmatprep.subr.mxu0 0.0
  %98 = vmatpush1.msra.mxu0 0.0
  %99 = vmatprep.subr.mxu0 0.0
  %100 = vmatpush1.msra.mxu0 0.0
  %101 = vmatprep.subr.mxu0 0.0
  %102 = vmatpush1.msra.mxu0 0.0
  %103 = vmatprep.subr.mxu0 0.0
  %104 = vmatpush1.msra.mxu0 0.0
  %105 = vmatprep.subr.mxu0 0.0
  %106 = vmatpush1.msra.mxu0 0.0
  %107 = vmatprep.subr.mxu0 0.0
  %108 = vmatpush1.msra.mxu0 0.0
  %109 = vmatprep.mubr.f32.mxu0 0.0
  %110 = vmatmul.mubr.f32.gmra.mrb[0].mxu0 %v20
  %v111 = vpop.f32.mrb[0].mxu0
  %v112 = vadd.f32 %v43, %v111
  %v113 = vpop.f32.mrb[0].mxu0
  %114 = vmatprep.mubr.f32.mxu0 0.0
  %115 = vmatmul.mubr.f32.gmra.mrb[0].mxu0 %v21
  %v116 = vpop.f32.mrb[0].mxu0
  %v117 = vadd.f32 %v43, %v116
  %v118 = vpop.f32.mrb[0].mxu0
  %119 = vdwg.mxu0
  %v120 = vmax.f32 %v112, 0.0
  %v121 = vmax.f32 %v117, 0.0
  %v122 = vld [vmem:[%s3] sm:$0xff]
  %v123 = vld [vmem:[%s3 + $0x8] sm:$0xff]
  %v124 = vld [vmem:[%s3 + $0x10] sm:$0xff]
  %v125 = vld [vmem:[%s3 + $0x18] sm:$0xff]
  %v126 = vld [vmem:[%s3 + $0x20] sm:$0xff]
  %v127 = vld [vmem:[%s3 + $0x28] sm:$0xff]
  %v128 = vld [vmem:[%s3 + $0x30] sm:$0xff]
  %v129 = vld [vmem:[%s3 + $0x38] sm:$0xff]
  %v130 = vld [vmem:[%s3 + $0x40] sm:$0xff]
  %v131 = vld [vmem:[%s3 + $0x48] sm:$0xff]
  %v132 = vld [vmem:[%s3 + $0x50] sm:$0xff]
  %v133 = vld [vmem:[%s3 + $0x58] sm:$0xff]
  %v134 = vld [vmem:[%s3 + $0x60] sm:$0xff]
  %v135 = vld [vmem:[%s3 + $0x68] sm:$0xff]
  %v136 = vld [vmem:[%s3 + $0x70] sm:$0xff]
  %v137 = vld [vmem:[%s3 + $0x78] sm:$0xff]
  %138 = vmatprep.subr.mxu0 0.0
  %139 = vmatpush1.msra.mxu0 %v122
  %140 = vmatprep.subr.mxu0 0.0
  %141 = vmatpush1.msra.mxu0 %v123
  %142 = vmatprep.subr.mxu0 0.0
  %143 = vmatpush1.msra.mxu0 %v124
  %144 = vmatprep.subr.mxu0 0.0
  %145 = vmatpush1.msra.mxu0 %v125
  %146 = vmatprep.subr.mxu0 0.0
  %147 = vmatpush1.msra.mxu0 %v126
  %148 = vmatprep.subr.mxu0 0.0
  %149 = vmatpush1.msra.mxu0 %v127
  %150 = vmatprep.subr.mxu0 0.0
  %151 = vmatpush1.msra.mxu0 %v128
  %152 = vmatprep.subr.mxu0 0.0
  %153 = vmatpush1.msra.mxu0 %v129
  %154 = vmatprep.subr.mxu0 0.0
  %155 = vmatpush1.msra.mxu0 %v130
  %156 = vmatprep.subr.mxu0 0.0
  %157 = vmatpush1.msra.mxu0 %v131
  %158 = vmatprep.subr.mxu0 0.0
  %159 = vmatpush1.msra.mxu0 %v132
  %160 = vmatprep.subr.mxu0 0.0
  %161 = vmatpush1.msra.mxu0 %v133
  %162 = vmatprep.subr.mxu0 0.0
  %163 = vmatpush1.msra.mxu0 %v134
  %164 = vmatprep.subr.mxu0 0.0
  %165 = vmatpush1.msra.mxu0 %v135
  %166 = vmatprep.subr.mxu0 0.0
  %167 = vmatpush1.msra.mxu0 %v136
  %168 = vmatprep.subr.mxu0 0.0
  %169 = vmatpush1.msra.mxu0 %v137
  %170 = vmatprep.subr.mxu0 0.0
  %171 = vmatpush1.msra.mxu0 0.0
  %172 = vmatprep.subr.mxu0 0.0
  %173 = vmatpush1.msra.mxu0 0.0
  %174 = vmatprep.subr.mxu0 0.0
  %175 = vmatpush1.msra.mxu0 0.0
  %176 = vmatprep.subr.mxu0 0.0
  %177 = vmatpush1.msra.mxu0 0.0
  %178 = vmatprep.subr.mxu0 0.0
  %179 = vmatpush1.msra.mxu0 0.0
  %180 = vmatprep.subr.mxu0 0.0
  %181 = vmatpush1.msra.mxu0 0.0
  %182 = vmatprep.subr.mxu0 0.0
  %183 = vmatpush1.msra.mxu0 0.0
  %184 = vmatprep.subr.mxu0 0.0
  %185 = vmatpush1.msra.mxu0 0.0
  %186 = vmatprep.subr.mxu0 0.0
  %187 = vmatpush1.msra.mxu0 0.0
  %188 = vmatprep.subr.mxu0 0.0
  %189 = vmatpush1.msra.mxu0 0.0
  %190 = vmatprep.subr.mxu0 0.0
  %191 = vmatpush1.msra.mxu0 0.0
  %192 = vmatprep.subr.mxu0 0.0
  %193 = vmatpush1.msra.mxu0 0.0
  %194 = vmatprep.subr.mxu0 0.0
  %195 = vmatpush1.msra.mxu0 0.0
  %196 = vmatprep.subr.mxu0 0.0
  %197 = vmatpush1.msra.mxu0 0.0
  %198 = vmatprep.subr.mxu0 0.0
  %199 = vmatpush1.msra.mxu0 0.0
  %200 = vmatprep.subr.mxu0 0.0
  %201 = vmatpush1.msra.mxu0 0.0
  %202 = vmatprep.mubr.f32.mxu0 0.0
  %203 = vmatmul.mubr.f32.gmra.mrb[0].mxu0 %v120
  %v204 = vpop.f32.mrb[0].mxu0
  %v205 = vadd.f32 0.0, %v204
  %v206 = vpop.f32.mrb[0].mxu0
  %207 = vmatprep.mubr.f32.mxu0 0.0
  %208 = vmatmul.mubr.f32.gmra.mrb[0].mxu0 %v121
  %v209 = vpop.f32.mrb[0].mxu0
  %v210 = vadd.f32 0.0, %v209
  %v211 = vpop.f32.mrb[0].mxu0
  %212 = vdwg.mxu0
  %p213 = scmp.eq.s32.totalorder 0, 0
  // Predicated region
  $region22: #{_prediction_heads_impl.1} parent=0 // pred_check
    %p214 = pneg %p213
  $region23: #{_prediction_heads_impl.1} parent=0 // pred_check_branch
    %216 = sbr.rel (%p214) target = $region25
  $region24: #{_prediction_heads_impl.1} parent=0 // pred_region
    %v217 = vld [vmem:[%s4] sm:$0x1]
    %v219 = vlaneseq
    %v220 = vshrl.u32 %v219, 7
    %v221 = vsub.s32 0, %v220
    %v222 = vrot.slane %v217, %v221
    %v224 = vadd.f32 %v205, %v222
    %v225 = vadd.f32 %v210, %v222
    %226 = vst [vmem:[%s5] sm:$0xff] %v224
    %227 = vst [vmem:[%s5 + $0x8] sm:$0xff] %v225
  $region25: #{_prediction_heads_impl.1} parent=0 // pred_fallthru
    _
  %p228 = scmp.ne.s32.totalorder 0, 0
  // Predicated region
  $region26: #{_prediction_heads_impl.1} parent=0 // pred_check
    %p229 = pneg %p228
  $region27: #{_prediction_heads_impl.1} parent=0 // pred_check_branch
    %231 = sbr.rel (%p229) target = $region29
  $region28: #{_prediction_heads_impl.1} parent=0 // pred_region
    %v232 = vld [vmem:[%s5] sm:$0xff]
    %v233 = vld [vmem:[%s5 + $0x8] sm:$0xff]
    %v234 = vadd.f32 %v232, %v205
    %v235 = vadd.f32 %v233, %v210
    %236 = vst [vmem:[%s5] sm:$0xff] %v234
    %237 = vst [vmem:[%s5 + $0x8] sm:$0xff] %v235
  $region29: #{_prediction_heads_impl.1} parent=0 // pred_fallthru
    _
  // Predicated region
  $region30: #{_prediction_heads_impl.1} parent=0 // pred_check
    _
  $region31: #{_prediction_heads_impl.1} parent=0 // pred_check_branch
    %239 = sbr.rel (0) target = $region33
  $region32: #{_prediction_heads_impl.1} parent=0 // pred_region
    _
  $region33: #{_prediction_heads_impl.1} parent=0 // pred_fallthru
    _
  // Predicated region
  $region34: #{_prediction_heads_impl.1} parent=0 // pred_check
    _
  $region35: #{_prediction_heads_impl.1} parent=0 // pred_check_branch
    %241 = sbr.rel (0) target = $region37
  $region36: #{_prediction_heads_impl.1} parent=0 // pred_region
    _
  $region37: #{_prediction_heads_impl.1} parent=0 // pred_fallthru
    _

// kernel: _prediction_heads_impl.1
$region0: #{_prediction_heads_impl.1}
  #allocation0 [shape = 'u32[]', space=smem, size = 0x4, offset = 0x4, fixed_abs, tag = 'smem constant byte address 0x4 - core index']
  #allocation1 [shape = 'u32[144,128]{1,0:T(1,128)}', space=vmem, size = 0x12000, scoped, tag = 'internal scratch']
  %s0 = inlined_call_operand.vmem [shape: f32[16,128], index: 0, kind: input, shape index: {}]
  %s1 = inlined_call_operand.vmem [shape: f32[128,128], index: 1, kind: input, shape index: {}]
  %s2 = inlined_call_operand.vmem [shape: f32[1,128], index: 2, kind: input, shape index: {}]
  %s3 = inlined_call_operand.vmem [shape: f32[128,128], index: 3, kind: input, shape index: {}]
  %s4 = inlined_call_operand.vmem [shape: f32[1,128], index: 4, kind: input, shape index: {}]
  %s5 = inlined_call_operand.vmem [shape: f32[16,128], index: 5, kind: output, shape index: {}]
  %s6 = sld [smem:[#allocation0]]
  $region38: #{_prediction_heads_impl.1} parent=0
    _
  %s8 = ssub.s32 1, %s6
  %s9 = scalar_select 0, %s8, %s6
  // Predicated region
  $region2: #{_prediction_heads_impl.1} parent=0 // pred_check
    _
  $region3: #{_prediction_heads_impl.1} parent=0 // pred_check_branch
    %11 = sbr.rel (0) target = $region5
  $region4: #{_prediction_heads_impl.1} parent=0 // pred_region
    _
  $region5: #{_prediction_heads_impl.1} parent=0 // pred_fallthru
    _
  // Predicated region
  $region6: #{_prediction_heads_impl.1} parent=0 // pred_check
    _
  $region7: #{_prediction_heads_impl.1} parent=0 // pred_check_branch
    %13 = sbr.rel (0) target = $region9
  $region8: #{_prediction_heads_impl.1} parent=0 // pred_region
    _
  $region9: #{_prediction_heads_impl.1} parent=0 // pred_fallthru
    _
  // Predicated region
  $region10: #{_prediction_heads_impl.1} parent=0 // pred_check
    _
  $region11: #{_prediction_heads_impl.1} parent=0 // pred_check_branch
    %15 = sbr.rel (0) target = $region13
  $region12: #{_prediction_heads_impl.1} parent=0 // pred_region
    _
  $region13: #{_prediction_heads_impl.1} parent=0 // pred_fallthru
    _
  // Predicated region
  $region14: #{_prediction_heads_impl.1} parent=0 // pred_check
    _
  $region15: #{_prediction_heads_impl.1} parent=0 // pred_check_branch
    %17 = sbr.rel (0) target = $region17
  $region16: #{_prediction_heads_impl.1} parent=0 // pred_region
    _
  $region17: #{_prediction_heads_impl.1} parent=0 // pred_fallthru
    _
  // Predicated region
  $region18: #{_prediction_heads_impl.1} parent=0 // pred_check
    _
  $region19: #{_prediction_heads_impl.1} parent=0 // pred_check_branch
    %19 = sbr.rel (0) target = $region21
  $region20: #{_prediction_heads_impl.1} parent=0 // pred_region
    _
  $region21: #{_prediction_heads_impl.1} parent=0 // pred_fallthru
    _
  %v20 = vld [vmem:[%s0] sm:$0xff]
  %v21 = vld [vmem:[%s0 + $0x8] sm:$0xff]
  %v22 = vld [vmem:[%s1] sm:$0xff]
  %v23 = vld [vmem:[%s1 + $0x8] sm:$0xff]
  %v24 = vld [vmem:[%s1 + $0x10] sm:$0xff]
  %v25 = vld [vmem:[%s1 + $0x18] sm:$0xff]
  %v26 = vld [vmem:[%s1 + $0x20] sm:$0xff]
  %v27 = vld [vmem:[%s1 + $0x28] sm:$0xff]
  %v28 = vld [vmem:[%s1 + $0x30] sm:$0xff]
  %v29 = vld [vmem:[%s1 + $0x38] sm:$0xff]
  %v30 = vld [vmem:[%s1 + $0x40] sm:$0xff]
  %v31 = vld [vmem:[%s1 + $0x48] sm:$0xff]
  %v32 = vld [vmem:[%s1 + $0x50] sm:$0xff]
  %v33 = vld [vmem:[%s1 + $0x58] sm:$0xff]
  %v34 = vld [vmem:[%s1 + $0x60] sm:$0xff]
  %v35 = vld [vmem:[%s1 + $0x68] sm:$0xff]
  %v36 = vld [vmem:[%s1 + $0x70] sm:$0xff]
  %v37 = vld [vmem:[%s1 + $0x78] sm:$0xff]
  %v38 = vld [vmem:[%s2] sm:$0x1]
  %v40 = vlaneseq
  %v41 = vshrl.u32 %v40, 7
  %v42 = vsub.s32 0, %v41
  %v43 = vrot.slane %v38, %v42
  %45 = vmatprep.subr.mxu0 0.0
  %46 = vmatpush1.msra.mxu0 %v22
  %47 = vmatprep.subr.mxu0 0.0
  %48 = vmatpush1.msra.mxu0 %v23
  %49 = vmatprep.subr.mxu0 0.0
  %50 = vmatpush1.msra.mxu0 %v24
  %51 = vmatprep.subr.mxu0 0.0
  %52 = vmatpush1.msra.mxu0 %v25
  %53 = vmatprep.subr.mxu0 0.0
  %54 = vmatpush1.msra.mxu0 %v26
  %55 = vmatprep.subr.mxu0 0.0
  %56 = vmatpush1.msra.mxu0 %v27
  %57 = vmatprep.subr.mxu0 0.0
  %58 = vmatpush1.msra.mxu0 %v28
  %59 = vmatprep.subr.mxu0 0.0
  %60 = vmatpush1.msra.mxu0 %v29
  %61 = vmatprep.subr.mxu0 0.0
  %62 = vmatpush1.msra.mxu0 %v30
  %63 = vmatprep.subr.mxu0 0.0
  %64 = vmatpush1.msra.mxu0 %v31
  %65 = vmatprep.subr.mxu0 0.0
  %66 = vmatpush1.msra.mxu0 %v32
  %67 = vmatprep.subr.mxu0 0.0
  %68 = vmatpush1.msra.mxu0 %v33
  %69 = vmatprep.subr.mxu0 0.0
  %70 = vmatpush1.msra.mxu0 %v34
  %71 = vmatprep.subr.mxu0 0.0
  %72 = vmatpush1.msra.mxu0 %v35
  %73 = vmatprep.subr.mxu0 0.0
  %74 = vmatpush1.msra.mxu0 %v36
  %75 = vmatprep.subr.mxu0 0.0
  %76 = vmatpush1.msra.mxu0 %v37
  %77 = vmatprep.subr.mxu0 0.0
  %78 = vmatpush1.msra.mxu0 0.0
  %79 = vmatprep.subr.mxu0 0.0
  %80 = vmatpush1.msra.mxu0 0.0
  %81 = vmatprep.subr.mxu0 0.0
  %82 = vmatpush1.msra.mxu0 0.0
  %83 = vmatprep.subr.mxu0 0.0
  %84 = vmatpush1.msra.mxu0 0.0
  %85 = vmatprep.subr.mxu0 0.0
  %86 = vmatpush1.msra.mxu0 0.0
  %87 = vmatprep.subr.mxu0 0.0
  %88 = vmatpush1.msra.mxu0 0.0
  %89 = vmatprep.subr.mxu0 0.0
  %90 = vmatpush1.msra.mxu0 0.0
  %91 = vmatprep.subr.mxu0 0.0
  %92 = vmatpush1.msra.mxu0 0.0
  %93 = vmatprep.subr.mxu0 0.0
  %94 = vmatpush1.msra.mxu0 0.0
  %95 = vmatprep.subr.mxu0 0.0
  %96 = vmatpush1.msra.mxu0 0.0
  %97 = vmatprep.subr.mxu0 0.0
  %98 = vmatpush1.msra.mxu0 0.0
  %99 = vmatprep.subr.mxu0 0.0
  %100 = vmatpush1.msra.mxu0 0.0
  %101 = vmatprep.subr.mxu0 0.0
  %102 = vmatpush1.msra.mxu0 0.0
  %103 = vmatprep.subr.mxu0 0.0
  %104 = vmatpush1.msra.mxu0 0.0
  %105 = vmatprep.subr.mxu0 0.0
  %106 = vmatpush1.msra.mxu0 0.0
  %107 = vmatprep.subr.mxu0 0.0
  %108 = vmatpush1.msra.mxu0 0.0
  %109 = vmatprep.mubr.f32.mxu0 0.0
  %110 = vmatmul.mubr.f32.gmra.mrb[0].mxu0 %v20
  %v111 = vpop.f32.mrb[0].mxu0
  %v112 = vadd.f32 %v43, %v111
  %v113 = vpop.f32.mrb[0].mxu0
  %114 = vmatprep.mubr.f32.mxu0 0.0
  %115 = vmatmul.mubr.f32.gmra.mrb[0].mxu0 %v21
  %v116 = vpop.f32.mrb[0].mxu0
  %v117 = vadd.f32 %v43, %v116
  %v118 = vpop.f32.mrb[0].mxu0
  %119 = vdwg.mxu0
  %v120 = vmax.f32 %v112, 0.0
  %v121 = vmax.f32 %v117, 0.0
  %v122 = vld [vmem:[%s3] sm:$0xff]
  %v123 = vld [vmem:[%s3 + $0x8] sm:$0xff]
  %v124 = vld [vmem:[%s3 + $0x10] sm:$0xff]
  %v125 = vld [vmem:[%s3 + $0x18] sm:$0xff]
  %v126 = vld [vmem:[%s3 + $0x20] sm:$0xff]
  %v127 = vld [vmem:[%s3 + $0x28] sm:$0xff]
  %v128 = vld [vmem:[%s3 + $0x30] sm:$0xff]
  %v129 = vld [vmem:[%s3 + $0x38] sm:$0xff]
  %v130 = vld [vmem:[%s3 + $0x40] sm:$0xff]
  %v131 = vld [vmem:[%s3 + $0x48] sm:$0xff]
  %v132 = vld [vmem:[%s3 + $0x50] sm:$0xff]
  %v133 = vld [vmem:[%s3 + $0x58] sm:$0xff]
  %v134 = vld [vmem:[%s3 + $0x60] sm:$0xff]
  %v135 = vld [vmem:[%s3 + $0x68] sm:$0xff]
  %v136 = vld [vmem:[%s3 + $0x70] sm:$0xff]
  %v137 = vld [vmem:[%s3 + $0x78] sm:$0xff]
  %138 = vmatprep.subr.mxu0 0.0
  %139 = vmatpush1.msra.mxu0 %v122
  %140 = vmatprep.subr.mxu0 0.0
  %141 = vmatpush1.msra.mxu0 %v123
  %142 = vmatprep.subr.mxu0 0.0
  %143 = vmatpush1.msra.mxu0 %v124
  %144 = vmatprep.subr.mxu0 0.0
  %145 = vmatpush1.msra.mxu0 %v125
  %146 = vmatprep.subr.mxu0 0.0
  %147 = vmatpush1.msra.mxu0 %v126
  %148 = vmatprep.subr.mxu0 0.0
  %149 = vmatpush1.msra.mxu0 %v127
  %150 = vmatprep.subr.mxu0 0.0
  %151 = vmatpush1.msra.mxu0 %v128
  %152 = vmatprep.subr.mxu0 0.0
  %153 = vmatpush1.msra.mxu0 %v129
  %154 = vmatprep.subr.mxu0 0.0
  %155 = vmatpush1.msra.mxu0 %v130
  %156 = vmatprep.subr.mxu0 0.0
  %157 = vmatpush1.msra.mxu0 %v131
  %158 = vmatprep.subr.mxu0 0.0
  %159 = vmatpush1.msra.mxu0 %v132
  %160 = vmatprep.subr.mxu0 0.0
  %161 = vmatpush1.msra.mxu0 %v133
  %162 = vmatprep.subr.mxu0 0.0
  %163 = vmatpush1.msra.mxu0 %v134
  %164 = vmatprep.subr.mxu0 0.0
  %165 = vmatpush1.msra.mxu0 %v135
  %166 = vmatprep.subr.mxu0 0.0
  %167 = vmatpush1.msra.mxu0 %v136
  %168 = vmatprep.subr.mxu0 0.0
  %169 = vmatpush1.msra.mxu0 %v137
  %170 = vmatprep.subr.mxu0 0.0
  %171 = vmatpush1.msra.mxu0 0.0
  %172 = vmatprep.subr.mxu0 0.0
  %173 = vmatpush1.msra.mxu0 0.0
  %174 = vmatprep.subr.mxu0 0.0
  %175 = vmatpush1.msra.mxu0 0.0
  %176 = vmatprep.subr.mxu0 0.0
  %177 = vmatpush1.msra.mxu0 0.0
  %178 = vmatprep.subr.mxu0 0.0
  %179 = vmatpush1.msra.mxu0 0.0
  %180 = vmatprep.subr.mxu0 0.0
  %181 = vmatpush1.msra.mxu0 0.0
  %182 = vmatprep.subr.mxu0 0.0
  %183 = vmatpush1.msra.mxu0 0.0
  %184 = vmatprep.subr.mxu0 0.0
  %185 = vmatpush1.msra.mxu0 0.0
  %186 = vmatprep.subr.mxu0 0.0
  %187 = vmatpush1.msra.mxu0 0.0
  %188 = vmatprep.subr.mxu0 0.0
  %189 = vmatpush1.msra.mxu0 0.0
  %190 = vmatprep.subr.mxu0 0.0
  %191 = vmatpush1.msra.mxu0 0.0
  %192 = vmatprep.subr.mxu0 0.0
  %193 = vmatpush1.msra.mxu0 0.0
  %194 = vmatprep.subr.mxu0 0.0
  %195 = vmatpush1.msra.mxu0 0.0
  %196 = vmatprep.subr.mxu0 0.0
  %197 = vmatpush1.msra.mxu0 0.0
  %198 = vmatprep.subr.mxu0 0.0
  %199 = vmatpush1.msra.mxu0 0.0
  %200 = vmatprep.subr.mxu0 0.0
  %201 = vmatpush1.msra.mxu0 0.0
  %202 = vmatprep.mubr.f32.mxu0 0.0
  %203 = vmatmul.mubr.f32.gmra.mrb[0].mxu0 %v120
  %v204 = vpop.f32.mrb[0].mxu0
  %v205 = vadd.f32 0.0, %v204
  %v206 = vpop.f32.mrb[0].mxu0
  %207 = vmatprep.mubr.f32.mxu0 0.0
  %208 = vmatmul.mubr.f32.gmra.mrb[0].mxu0 %v121
  %v209 = vpop.f32.mrb[0].mxu0
  %v210 = vadd.f32 0.0, %v209
  %v211 = vpop.f32.mrb[0].mxu0
  %212 = vdwg.mxu0
  %p213 = scmp.eq.s32.totalorder 0, 0
  // Predicated region
  $region22: #{_prediction_heads_impl.1} parent=0 // pred_check
    %p214 = pneg %p213
  $region23: #{_prediction_heads_impl.1} parent=0 // pred_check_branch
    %216 = sbr.rel (%p214) target = $region25
  $region24: #{_prediction_heads_impl.1} parent=0 // pred_region
    %v217 = vld [vmem:[%s4] sm:$0x1]
    %v219 = vlaneseq
    %v220 = vshrl.u32 %v219, 7
    %v221 = vsub.s32 0, %v220
    %v222 = vrot.slane %v217, %v221
    %v224 = vadd.f32 %v205, %v222
    %v225 = vadd.f32 %v210, %v222
    %226 = vst [vmem:[%s5] sm:$0xff] %v224
    %227 = vst [vmem:[%s5 + $0x8] sm:$0xff] %v225
  $region25: #{_prediction_heads_impl.1} parent=0 // pred_fallthru
    _
  %p228 = scmp.ne.s32.totalorder 0, 0
  // Predicated region
  $region26: #{_prediction_heads_impl.1} parent=0 // pred_check
    %p229 = pneg %p228
  $region27: #{_prediction_heads_impl.1} parent=0 // pred_check_branch
    %231 = sbr.rel (%p229) target = $region29
  $region28: #{_prediction_heads_impl.1} parent=0 // pred_region
    %v232 = vld [vmem:[%s5] sm:$0xff]
    %v233 = vld [vmem:[%s5 + $0x8] sm:$0xff]
    %v234 = vadd.f32 %v232, %v205
    %v235 = vadd.f32 %v233, %v210
    %236 = vst [vmem:[%s5] sm:$0xff] %v234
    %237 = vst [vmem:[%s5 + $0x8] sm:$0xff] %v235
  $region29: #{_prediction_heads_impl.1} parent=0 // pred_fallthru
    _
  // Predicated region
  $region30: #{_prediction_heads_impl.1} parent=0 // pred_check
    _
  $region31: #{_prediction_heads_impl.1} parent=0 // pred_check_branch
    %239 = sbr.rel (0) target = $region33
  $region32: #{_prediction_heads_impl.1} parent=0 // pred_region
    _
  $region33: #{_prediction_heads_impl.1} parent=0 // pred_fallthru
    _
  // Predicated region
  $region34: #{_prediction_heads_impl.1} parent=0 // pred_check
    _
  $region35: #{_prediction_heads_impl.1} parent=0 // pred_check_branch
    %241 = sbr.rel (0) target = $region37
  $region36: #{_prediction_heads_impl.1} parent=0 // pred_region
    _
  $region37: #{_prediction_heads_impl.1} parent=0 // pred_fallthru
    _

</llo_original>
